<compile_context>
chip_gen: v7x
topology: tpu7x:2x2x1
jax: 0.10.0
libtpu: 0.0.40
codegen_flags: <defaults>
</compile_context>

<pallas_src>
import jax
import jax.numpy as jnp
import numpy as np
from jax import lax
from jax.experimental import pallas as pl
from jax.experimental.pallas import tpu as pltpu


def _round_up(x, m):
    return (x + m - 1) // m * m


def make_conv1d_kernel(kernel_size: int, dilation: int, l_tile: int,
                       compute_dtype):
    halo = (kernel_size - 1) * dilation
    win = l_tile + halo

    def conv1d_kernel(x_ref, w_ref, b_ref, o_ref):
        # x_ref: (C_in, L_pad_total)  padded input row (batch dim squeezed)
        # w_ref: (C_out, K*C_in)      fused tap-major weights (grid-invariant)
        # b_ref: (C_out, 1)           bias (grid-invariant)
        # o_ref: (C_out, L_tile)      lane-dense output tile
        lt = pl.program_id(1)
        start = pl.multiple_of(lt * l_tile, 128)
        xw = x_ref[:, pl.ds(start, win)]                 # (C_in, L_tile + halo)

        # Stack the K shifted views along the channel (sublane) axis so the
        # whole conv is one (C_out, K*C_in) x (K*C_in, L_tile) matmul.
        parts = [xw[:, k * dilation:k * dilation + l_tile]
                 for k in range(kernel_size)]
        xs = jnp.concatenate(parts, axis=0)              # (K*C_in, L_tile)

        w = w_ref[...]
        if compute_dtype is not None:
            xs = xs.astype(compute_dtype)
            w = w.astype(compute_dtype)
        acc = jnp.dot(w, xs, preferred_element_type=jnp.float32)
        o_ref[...] = (acc + b_ref[...]).astype(o_ref.dtype)

    return conv1d_kernel


def conv_norm_forward(x, weight, bias, *, stride=1, dilation=1, padding=None,
                      compute_dtype=None):
    """ConvNorm.forward: 1-D convolution, NCL layout (matches torch Conv1d).

    x:      (N, C_in, L)
    weight: (C_out, C_in, K)   (PyTorch Conv1d weight layout)
    bias:   (C_out,)
    """
    assert stride == 1, "ConvNorm default (stride=1) implemented"
    n, c_in, length = x.shape
    c_out, c_in_w, k = weight.shape
    assert c_in == c_in_w
    if padding is None:
        assert k % 2 == 1
        padding = dilation * (k - 1) // 2
    halo = dilation * (k - 1)
    out_len = length + 2 * padding - halo
    assert out_len > 0

    # Lane-dense output: pad out_len up to a multiple of 128 and pick an
    # L tile (multiple of 128) that divides it; slice the pad off at the end.
    out_pad = _round_up(out_len, 128)
    l_tile = next(c for c in (512, 256, 128) if out_pad % c == 0)
    num_l_tiles = out_pad // l_tile

    # Pad the length axis once: conv "same" padding on the left, conv padding
    # plus lane-roundup slack (+ halo reach of the padded tail) on the right.
    # TODO(synk): remove this extra HBM pass by DMA-ing the unpadded row into a
    # zero-initialized VMEM halo buffer inside the kernel (manual async_copy).
    l_pad_total = out_pad + halo
    x_pad = jnp.pad(
        x, ((0, 0), (0, 0), (padding, l_pad_total - length - padding)))

    # Fused tap-major weights: (C_out, C_in, K) -> (C_out, K*C_in); row order
    # [tap0 ch0..chC-1, tap1 ch0..chC-1, ...] matches the stacked input operand.
    w_fused = jnp.transpose(weight, (0, 2, 1)).reshape(c_out, k * c_in)
    b_col = bias.reshape(c_out, 1)

    kernel = make_conv1d_kernel(k, dilation, l_tile, compute_dtype)

    # VMEM budget (double-buffered input row + resident weights + out tiles),
    # capped so it also fits v7x's 64 MiB physical VMEM.
    itemsize = x.dtype.itemsize
    vmem_est = (2 * c_in * l_pad_total * itemsize
                + 2 * c_out * k * c_in * itemsize
                + 2 * c_out * l_tile * 4
                + (2 << 20))
    vmem_limit = int(min(max(vmem_est, 32 << 20), 48 << 20))

    out = pl.pallas_call(
        kernel,
        out_shape=jax.ShapeDtypeStruct((n, c_out, out_pad), x.dtype),
        grid_spec=pltpu.PrefetchScalarGridSpec(
            num_scalar_prefetch=0,
            grid=(n, num_l_tiles),
            in_specs=[
                # Full padded row per batch element (resident across L tiles).
                pl.BlockSpec((None, c_in, l_pad_total),
                             lambda b, lt: (b, 0, 0)),
                # Grid-invariant fused weights / bias: stay resident in VMEM.
                pl.BlockSpec((c_out, k * c_in), lambda b, lt: (0, 0)),
                pl.BlockSpec((c_out, 1), lambda b, lt: (0, 0)),
            ],
            out_specs=pl.BlockSpec((None, c_out, l_tile),
                                   lambda b, lt: (b, 0, lt)),
        ),
        compiler_params=pltpu.CompilerParams(
            dimension_semantics=("parallel", "parallel"),
            vmem_limit_bytes=vmem_limit),
    )(x_pad, w_fused, b_col)

    return out[:, :, :out_len]


def xavier_uniform_conv1d_weight(key, c_out, c_in, k, gain=1.0):
    # torch.nn.init.xavier_uniform_ on a Conv1d weight:
    # fan_in = c_in*k, fan_out = c_out*k, bound = gain*sqrt(6/(fan_in+fan_out))
    fan_in = c_in * k
    fan_out = c_out * k
    bound = gain * np.sqrt(6.0 / (fan_in + fan_out))
    return jax.random.uniform(key, (c_out, c_in, k), jnp.float32, -bound, bound)


if __name__ == "__main__":
    # ConvNorm(dimensions=1, in_channels=4, out_channels=8, kernel_size=5)
    N, C_IN, C_OUT, L, K = 2, 4, 8, 16, 5
    DILATION = 1

    key = jax.random.PRNGKey(0)
    kx, kw, kb = jax.random.split(key, 3)

    x = jax.random.normal(kx, (N, C_IN, L), dtype=jnp.float32)
    weight = xavier_uniform_conv1d_weight(kw, C_OUT, C_IN, K, gain=1.0)
    # Conv1d default bias init: U(-1/sqrt(fan_in), 1/sqrt(fan_in))
    b_bound = 1.0 / np.sqrt(C_IN * K)
    bias = jax.random.uniform(kb, (C_OUT,), jnp.float32, -b_bound, b_bound)

    out = conv_norm_forward(x, weight, bias, dilation=DILATION)
    out = jax.block_until_ready(out)

    # Reference: XLA convolution (same semantics as torch Conv1d).
    pad = DILATION * (K - 1) // 2
    ref = lax.conv_general_dilated(
        x, weight,
        window_strides=(1,),
        padding=[(pad, pad)],
        rhs_dilation=(DILATION,),
        dimension_numbers=("NCH", "OIH", "NCH"),
    ) + bias.reshape(1, C_OUT, 1)

    np.testing.assert_allclose(np.asarray(out), np.asarray(ref),
                               rtol=1e-5, atol=1e-5)
    print("KERNEL_OK")
</pallas_src>

<mosaic_0001>
module attributes {stable_mosaic.version = 11 : i64} {
  func.func @conv1d_kernel(%arg0: i32, %arg1: i32, %arg2: memref<1x4x132xf32, #tpu.memory_space<vmem>>, %arg3: memref<8x20xf32, #tpu.memory_space<vmem>>, %arg4: memref<8x1xf32, #tpu.memory_space<vmem>>, %arg5: memref<1x8x128xf32, #tpu.memory_space<vmem>>) attributes {dimension_semantics = [#tpu.dimension_semantics<parallel>, #tpu.dimension_semantics<parallel>], iteration_bounds = array<i64: 2, 1>, scalar_prefetch = 0 : i64, scratch_operands = 0 : i64, tpu.core_type = #tpu.core_type<tc>, window_params = [{transform_indices = @transform_0, window_bounds = array<i64: 1, 4, 132>}, {pipeline_mode = #tpu.pipeline_mode<synchronous>, transform_indices = @transform_1, window_bounds = array<i64: 8, 20>}, {pipeline_mode = #tpu.pipeline_mode<synchronous>, transform_indices = @transform_2, window_bounds = array<i64: 8, 1>}, {transform_indices = @transform_3, window_bounds = array<i64: 1, 8, 128>}]} {
    %c128_i32 = arith.constant 128 : i32
    %0 = arith.muli %arg1, %c128_i32 : i32
    %1 = tpu.assume_multiple %0, 128 : i32
    %c0 = arith.constant 0 : index
    %c0_0 = arith.constant 0 : index
    %2 = arith.index_cast %1 : i32 to index
    %3 = vector.load %arg2[%c0, %c0_0, %2] : memref<1x4x132xf32, #tpu.memory_space<vmem>>, vector<1x4x132xf32>
    %4 = vector.shape_cast %3 : vector<1x4x132xf32> to vector<4x132xf32>
    %5 = vector.extract_strided_slice %4 {offsets = [0, 0], sizes = [4, 128], strides = [1, 1]} : vector<4x132xf32> to vector<4x128xf32>
    %6 = vector.extract_strided_slice %4 {offsets = [0, 1], sizes = [4, 128], strides = [1, 1]} : vector<4x132xf32> to vector<4x128xf32>
    %7 = vector.extract_strided_slice %4 {offsets = [0, 2], sizes = [4, 128], strides = [1, 1]} : vector<4x132xf32> to vector<4x128xf32>
    %8 = vector.extract_strided_slice %4 {offsets = [0, 3], sizes = [4, 128], strides = [1, 1]} : vector<4x132xf32> to vector<4x128xf32>
    %9 = vector.extract_strided_slice %4 {offsets = [0, 4], sizes = [4, 128], strides = [1, 1]} : vector<4x132xf32> to vector<4x128xf32>
    %10 = tpu.concatenate %5, %6, %7, %8, %9 in 0 : vector<4x128xf32>, vector<4x128xf32>, vector<4x128xf32>, vector<4x128xf32>, vector<4x128xf32> -> vector<20x128xf32>
    %c0_1 = arith.constant 0 : index
    %c0_2 = arith.constant 0 : index
    %11 = vector.load %arg3[%c0_1, %c0_2] : memref<8x20xf32, #tpu.memory_space<vmem>>, vector<8x20xf32>
    %cst = arith.constant dense<0.000000e+00> : vector<8x128xf32>
    %12 = tpu.matmul %11, %10, %cst {dimension_numbers = #tpu.dot_dimension_numbers<[1], [0], [0], [1], [0, 0, 1, 1], [], []>} : vector<8x20xf32>, vector<20x128xf32>, vector<8x128xf32> -> vector<8x128xf32>
    %c0_3 = arith.constant 0 : index
    %c0_4 = arith.constant 0 : index
    %13 = vector.load %arg4[%c0_3, %c0_4] : memref<8x1xf32, #tpu.memory_space<vmem>>, vector<8x1xf32>
    %14 = vector.broadcast %13 : vector<8x1xf32> to vector<8x128xf32>
    %15 = arith.addf %12, %14 : vector<8x128xf32>
    %c0_5 = arith.constant 0 : index
    %c0_6 = arith.constant 0 : index
    %c0_7 = arith.constant 0 : index
    %16 = vector.load %arg5[%c0_5, %c0_6, %c0_7] : memref<1x8x128xf32, #tpu.memory_space<vmem>>, vector<1x8x128xf32>
    %17 = vector.shape_cast %16 : vector<1x8x128xf32> to vector<8x128xf32>
    %18 = vector.shape_cast %15 : vector<8x128xf32> to vector<1x8x128xf32>
    tpu.vector_store %arg5[%c0_5, %c0_6, %c0_7], %18 {strides = array<i32>} : memref<1x8x128xf32, #tpu.memory_space<vmem>>, vector<1x8x128xf32>,
    return
  }
  func.func @transform_0(%arg0: i32, %arg1: i32) -> (i32, i32, i32) {
    %c0_i32 = arith.constant 0 : i32
    %c0_i32_0 = arith.constant 0 : i32
    %c0_i32_1 = arith.constant 0 : i32
    return %arg0, %c0_i32, %c0_i32_0 : i32, i32, i32
  }
  func.func @transform_1(%arg0: i32, %arg1: i32) -> (i32, i32) {
    %c0_i32 = arith.constant 0 : i32
    %c0_i32_0 = arith.constant 0 : i32
    %c0_i32_1 = arith.constant 0 : i32
    return %c0_i32, %c0_i32_0 : i32, i32
  }
  func.func @transform_2(%arg0: i32, %arg1: i32) -> (i32, i32) {
    %c0_i32 = arith.constant 0 : i32
    %c0_i32_0 = arith.constant 0 : i32
    %c0_i32_1 = arith.constant 0 : i32
    return %c0_i32, %c0_i32_0 : i32, i32
  }
  func.func @transform_3(%arg0: i32, %arg1: i32) -> (i32, i32, i32) {
    %c0_i32 = arith.constant 0 : i32
    %c0_i32_0 = arith.constant 0 : i32
    return %arg0, %c0_i32, %arg1 : i32, i32, i32
  }
}

</mosaic_0001>

<llo_original>
// kernel: tpu_custom_call.1
$region0: #{tpu_custom_call.1}
  #allocation0 [shape = 'u32[]', space=smem, size = 0x4, offset = 0x4, fixed_abs, tag = 'smem constant byte address 0x4 - core index']
  #allocation1 [shape = 'u32[144,128]{1,0:T(1,128)}', space=vmem, size = 0x12000, scoped, tag = 'internal scratch']
  %s0 = inlined_call_operand.hbm [shape: f32[2,4,132], index: 0, kind: input, shape index: {}]
  %s1 = inlined_call_operand.vmem [shape: f32[8,20], index: 1, kind: input, shape index: {}]
  %s2 = inlined_call_operand.vmem [shape: f32[8,1], index: 2, kind: input, shape index: {}]
  %s3 = inlined_call_operand.hbm [shape: f32[2,8,128], index: 3, kind: output, shape index: {}]
  %s4 = sld [smem:[#allocation0]]
  $region49: #{tpu_custom_call.1} parent=0
    _
  %s6 = ssub.s32 1, %s4
  %s7 = scalar_select 0, %s6, %s4
  $region1: #{tpu_custom_call.1} parent=0
    #allocation2 [shape = 'u8[8192]{0}', space=vmem, size = 0x2000, scoped, tag = 'input window, operand 0']
    #allocation3 [shape = 's32[2]{0}', space=sflag, size = 0x8, scoped, tag = 'scoped memory for tpu_custom_call.1']
    #allocation4 [shape = 's32[2]{0}', space=sflag, size = 0x8, scoped, tag = 'scoped memory for tpu_custom_call.1']
    #allocation5 [shape = 'u8[8192]{0}', space=vmem, size = 0x2000, scoped, tag = 'output window, operand 0']
    %8 = vsyncpa [#allocation3], 0
    %s9 = scalar_lea.sflag [#allocation3], 1
    %10 = vsyncpa %s9, 0
    %11 = vsyncpa [#allocation4], 0
    %s12 = scalar_lea.sflag [#allocation4], 1
    %13 = vsyncpa %s12, 0
    loop: start=0, step=1, limit=4
    $region2: #{tpu_custom_call.1} parent=1 // loop_pre_header
      _
    $region3: #{tpu_custom_call.1} parent=1 // loop_header
      %s15 = sphi 0, %s19
      %p16 = scmp.ge.s32.totalorder %s15, 4
      %s22 = sphi 0, %s34
      %s23 = sphi 0, %s30
      %s24 = sphi 0, %s22
      %s25 = sphi 0, %s23
      %s26 = sphi 0, %s24
      %s27 = sphi 0, %s25
      %s37 = sphi 0, %s39
      %s40 = sphi 0, %s37
      %s41 = sphi 0, %s40
      %s57 = sphi 0, %s41
      %s61 = sphi 0, %s61
      %s63 = sphi 0, %s61
      %s64 = sphi 0, %s63
      %s78 = sphi 0, %s64
      %s82 = sphi 0, %s82
      %s84 = sphi 0, %s82
      %s85 = sphi 0, %s84
      %s99 = sphi 0, %s85
      %s107 = sphi 0, %s109
      %s110 = sphi 0, %s107
      %s111 = sphi 0, %s110
      %s127 = sphi 0, %s111
    $region4: #{tpu_custom_call.1} parent=1 // loop_header_branch
      %18 = sbr.rel (%p16) target = $region8
    $region5: #{tpu_custom_call.1} parent=1 // loop_body
      %s20 = ssub.s32 %s15, 1
      %s21 = ssub.s32 %s15, 2
      %s28 = sadd.s32 1, %s23
      %p29 = scmp.ge.s32.totalorder %s28, 1
      %s30 = scalar_select %p29, 0, %s28
      %s31 = sadd.s32 1, %s22
      %s32 = scalar_select %p29, %s31, %s22
      %p33 = scmp.ge.s32.totalorder %s32, 2
      %s34 = scalar_select %p33, 0, %s32
      %s35 = ssub.s32 %s22, %s34
      %p36 = scmp.eq.s32.totalorder %s35, 0
      %s38 = sadd.s32 %s37, 1
      %s39 = scalar_select %p36, %s37, %s38
      %p42 = pneg %p36
      %p43 = scmp.eq.s32.totalorder %s15, 1
      %p44 = por %p42, %p43
      %p45 = scmp.ne.s32.totalorder %s37, %s40
      %p46 = scmp.eq.s32.totalorder %s15, 0
      %p47 = por %p45, %p46
      %p48 = scmp.ne.s32.totalorder %s37, %s40
      %p49 = scmp.eq.s32.totalorder %s20, 1
      %p50 = por %p48, %p49
      %p51 = scmp.ne.s32.totalorder %s40, %s41
      %p52 = scmp.eq.s32.totalorder %s20, 0
      %p53 = por %p51, %p52
      %p54 = scmp.ne.s32.totalorder %s40, %s41
      %p55 = scmp.eq.s32.totalorder %s21, 1
      %p56 = por %p54, %p55
      %p58 = scmp.ne.s32.totalorder %s41, %s57
      %p59 = scmp.eq.s32.totalorder %s21, 0
      %p60 = por %p58, %p59
      %s62 = sadd.s32 %s61, 1
      %p65 = scmp.eq.s32.totalorder %s15, 1
      %p66 = scmp.ne.s32.totalorder %s61, %s63
      %p67 = scmp.eq.s32.totalorder %s15, 0
      %p68 = por %p66, %p67
      %p69 = scmp.ne.s32.totalorder %s61, %s63
      %p70 = scmp.eq.s32.totalorder %s20, 1
      %p71 = por %p69, %p70
      %p72 = scmp.ne.s32.totalorder %s63, %s64
      %p73 = scmp.eq.s32.totalorder %s20, 0
      %p74 = por %p72, %p73
      %p75 = scmp.ne.s32.totalorder %s63, %s64
      %p76 = scmp.eq.s32.totalorder %s21, 1
      %p77 = por %p75, %p76
      %p79 = scmp.ne.s32.totalorder %s64, %s78
      %p80 = scmp.eq.s32.totalorder %s21, 0
      %p81 = por %p79, %p80
      %s83 = sadd.s32 %s82, 1
      %p86 = scmp.eq.s32.totalorder %s15, 1
      %p87 = scmp.ne.s32.totalorder %s82, %s84
      %p88 = scmp.eq.s32.totalorder %s15, 0
      %p89 = por %p87, %p88
      %p90 = scmp.ne.s32.totalorder %s82, %s84
      %p91 = scmp.eq.s32.totalorder %s20, 1
      %p92 = por %p90, %p91
      %p93 = scmp.ne.s32.totalorder %s84, %s85
      %p94 = scmp.eq.s32.totalorder %s20, 0
      %p95 = por %p93, %p94
      %p96 = scmp.ne.s32.totalorder %s84, %s85
      %p97 = scmp.eq.s32.totalorder %s21, 1
      %p98 = por %p96, %p97
      %p100 = scmp.ne.s32.totalorder %s85, %s99
      %p101 = scmp.eq.s32.totalorder %s21, 0
      %p102 = por %p100, %p101
      %s103 = ssub.s32 %s22, %s34
      %s104 = ssub.s32 %s23, %s30
      %s105 = sor.u32 %s103, %s104
      %p106 = scmp.eq.s32.totalorder %s105, 0
      %s108 = sadd.s32 %s107, 1
      %s109 = scalar_select %p106, %s107, %s108
      %p112 = pneg %p106
      %p113 = scmp.eq.s32.totalorder %s15, 1
      %p114 = por %p112, %p113
      %p115 = scmp.ne.s32.totalorder %s107, %s110
      %p116 = scmp.eq.s32.totalorder %s15, 0
      %p117 = por %p115, %p116
      %p118 = scmp.ne.s32.totalorder %s107, %s110
      %p119 = scmp.eq.s32.totalorder %s20, 1
      %p120 = por %p118, %p119
      %p121 = scmp.ne.s32.totalorder %s110, %s111
      %p122 = scmp.eq.s32.totalorder %s20, 0
      %p123 = por %p121, %p122
      %p124 = scmp.ne.s32.totalorder %s110, %s111
      %p125 = scmp.eq.s32.totalorder %s21, 1
      %p126 = por %p124, %p125
      %p128 = scmp.ne.s32.totalorder %s111, %s127
      %p129 = scmp.eq.s32.totalorder %s21, 0
      %p130 = por %p128, %p129
      %p131 = scmp.le.s32.totalorder 1, %s15
      %p132 = scmp.lt.s32.totalorder %s15, 3
      %p133 = pnand %p131, %p132
      %p134 = pneg %p133
      // Predicated region
      $region9: #{tpu_custom_call.1} parent=5 // pred_check
        _
      $region10: #{tpu_custom_call.1} parent=5 // pred_check_branch
        %136 = sbr.rel (%p133) target = $region12
      $region11: #{tpu_custom_call.1} parent=5 // pred_region
        %s137 = ssub.s32 %s15, 1
        // Predicated region
        $region13: #{tpu_custom_call.1} parent=11 // pred_check
          %p138 = pneg %p74
        $region14: #{tpu_custom_call.1} parent=11 // pred_check_branch
          %140 = sbr.rel (%p138) target = $region16
        $region15: #{tpu_custom_call.1} parent=11 // pred_region
          _
        $region16: #{tpu_custom_call.1} parent=11 // pred_fallthru
          _
        // Predicated region
        $region17: #{tpu_custom_call.1} parent=11 // pred_check
          %p141 = pneg %p95
        $region18: #{tpu_custom_call.1} parent=11 // pred_check_branch
          %143 = sbr.rel (%p141) target = $region20
        $region19: #{tpu_custom_call.1} parent=11 // pred_region
          _
        $region20: #{tpu_custom_call.1} parent=11 // pred_fallthru
          _
      $region12: #{tpu_custom_call.1} parent=5 // pred_fallthru
        _
      %p144 = scmp.lt.s32.totalorder %s15, 2
      // Predicated region
      $region21: #{tpu_custom_call.1} parent=5 // pred_check
        %p145 = pneg %p144
      $region22: #{tpu_custom_call.1} parent=5 // pred_check_branch
        %147 = sbr.rel (%p145) target = $region24
      $region23: #{tpu_custom_call.1} parent=5 // pred_region
        // Predicated region
        $region25: #{tpu_custom_call.1} parent=23 // pred_check
          %p148 = pneg %p47
        $region26: #{tpu_custom_call.1} parent=23 // pred_check_branch
          %150 = sbr.rel (%p148) target = $region28
        $region27: #{tpu_custom_call.1} parent=23 // pred_region
          %s151 = sand.u32 %s37, 1
          %s152 = scalar_lea.sflag [#allocation3], %s151
          %s153 = sand.u32 %s37, 1
          %s154 = smul.addr %s153, 8
          %s155 = scalar_lea.vmem [#allocation2], %s154
          %s157 = ssub.s32 128, 128
          %158 = vsyncadd %s152, %s157
          %s159 = smul.addr %s22, 2
          %s160 = smul.addr %s159, 64
          %s161 = scalar_lea.hbm %s0, %s160
          %s163 = sshll.u32 %s155, 4
          %s164 = int_to_ptr.vmem [resolvable:$true] %s163
          %166 = dma.hbm_to_vmem [thread:$0]  %s161, 128, %s164, %s152
        $region28: #{tpu_custom_call.1} parent=23 // pred_fallthru
          _
      $region24: #{tpu_custom_call.1} parent=5 // pred_fallthru
        _
      %p167 = scmp.le.s32.totalorder 1, %s15
      %p168 = scmp.lt.s32.totalorder %s15, 3
      %p169 = pnand %p167, %p168
      %p170 = pneg %p169
      // Predicated region
      $region29: #{tpu_custom_call.1} parent=5 // pred_check
        _
      $region30: #{tpu_custom_call.1} parent=5 // pred_check_branch
        %172 = sbr.rel (%p169) target = $region32
      $region31: #{tpu_custom_call.1} parent=5 // pred_region
        %s173 = ssub.s32 %s15, 1
        %s174 = sand.u32 %s40, 1
        %s175 = scalar_lea.sflag [#allocation3], %s174
        %s176 = sand.u32 %s40, 1
        %s177 = smul.addr %s176, 8
        %s178 = scalar_lea.vmem [#allocation2], %s177
        // Predicated region
        $region33: #{tpu_custom_call.1} parent=31 // pred_check
          %p179 = pneg %p53
        $region34: #{tpu_custom_call.1} parent=31 // pred_check_branch
          %181 = sbr.rel (%p179) target = $region36
        $region35: #{tpu_custom_call.1} parent=31 // pred_region
          %182 = dma.done %s175, 128
        $region36: #{tpu_custom_call.1} parent=31 // pred_fallthru
          _
        %s183 = sand.u32 %s40, 1
        %s184 = scalar_lea.sflag [#allocation3], %s183
        %s185 = sand.u32 %s40, 1
        %s186 = smul.addr %s185, 8
        %s187 = scalar_lea.vmem [#allocation2], %s186
        %p188 = pneg %p53
        %p189 = pneg %p50
        %p190 = pneg %p74
        %p191 = pneg %p71
        %p192 = pneg %p95
        %p193 = pneg %p92
        %p194 = pneg %p123
        %p195 = pneg %p120
        %s196 = sand.u32 %s110, 1
        %s197 = scalar_lea.sflag [#allocation4], %s196
        %s198 = sand.u32 %s110, 1
        %s199 = smul.addr %s198, 8
        %s200 = scalar_lea.vmem [#allocation5], %s199
        %s201 = smul.u32 %s25, 128
        %s202 = sshra.s32 %s201, 7
        %s203 = sand.u32 %s201, 127
        %s204 = smul.addr %s202, 4
        %s205 = scalar_lea.vmem %s178, %s204 [#allocation2]
        %v206 = vld [vmem:[%s205] sm:$0xff]
        %v208 = vcombine.low %v206, %v206
        %209 = vrot.lane.b32.xlu0 %v208, 127
        %v210 = vpop.permute.xlu0 %209
        %211 = vrot.lane.b32.xlu0 %v206, 127
        %v212 = vpop.permute.xlu0 %211
        %vm213 = vcmask 1039360
        %v214 = vsel %vm213, %v210, %v212
        %v216 = vcombine.high %v206, %v206
        %217 = vrot.lane.b32.xlu0 %v206, 126
        %v218 = vpop.permute.xlu0 %217
        %219 = vrot.lane.b32.xlu0 %v216, 126
        %v220 = vpop.permute.xlu0 %219
        %vm221 = vcmask 1031168
        %v222 = vsel %vm221, %v218, %v220
        %224 = vrot.lane.b32.xlu0 %v208, 125
        %v225 = vpop.permute.xlu0 %224
        %226 = vrot.lane.b32.xlu0 %v206, 125
        %v227 = vpop.permute.xlu0 %226
        %vm228 = vcmask 1022976
        %v229 = vsel %vm228, %v225, %v227
        %231 = vrot.lane.b32.xlu0 %v206, 124
        %v232 = vpop.permute.xlu0 %231
        %233 = vrot.lane.b32.xlu0 %v216, 124
        %v234 = vpop.permute.xlu0 %233
        %vm235 = vcmask 1014784
        %v236 = vsel %vm235, %v232, %v234
        %vm237 = vcmask 1043456
        %v238 = vsel %vm237, %v206, %v214
        %v239 = vsel %vm237, %v222, %v229
        %v240 = vld [vmem:[%s1] sm:$0xff]
        %v241 = vld [vmem:[%s2] sm:$0xff]
        %243 = vset.pattern.permute.xlu0 0
        %244 = vperm.xlu0 %243, %v241
        %v245 = vpop.permute.xlu0 %244
        %vm247 = vcmask 162816
        %v249 = vsel %vm247, %v240, 0
        %v251 = vsel %vm237, %v236, 0
        %253 = vmatprep.subr.mxu0 0.0
        %254 = vmatpush1.msra.mxu0 %v238
        %255 = vmatprep.subr.mxu0 0.0
        %256 = vmatpush1.msra.mxu0 %v239
        %257 = vmatprep.subr.mxu0 0.0
        %258 = vmatpush1.msra.mxu0 %v251
        %259 = vmatprep.subr.mxu0 0.0
        %260 = vmatpush1.msra.mxu0 0.0
        %261 = vmatprep.subr.mxu0 0.0
        %262 = vmatpush1.msra.mxu0 0.0
        %263 = vmatprep.subr.mxu0 0.0
        %264 = vmatpush1.msra.mxu0 0.0
        %265 = vmatprep.subr.mxu0 0.0
        %266 = vmatpush1.msra.mxu0 0.0
        %267 = vmatprep.subr.mxu0 0.0
        %268 = vmatpush1.msra.mxu0 0.0
        %269 = vmatprep.subr.mxu0 0.0
        %270 = vmatpush1.msra.mxu0 0.0
        %271 = vmatprep.subr.mxu0 0.0
        %272 = vmatpush1.msra.mxu0 0.0
        %273 = vmatprep.subr.mxu0 0.0
        %274 = vmatpush1.msra.mxu0 0.0
        %275 = vmatprep.subr.mxu0 0.0
        %276 = vmatpush1.msra.mxu0 0.0
        %277 = vmatprep.subr.mxu0 0.0
        %278 = vmatpush1.msra.mxu0 0.0
        %279 = vmatprep.subr.mxu0 0.0
        %280 = vmatpush1.msra.mxu0 0.0
        %281 = vmatprep.subr.mxu0 0.0
        %282 = vmatpush1.msra.mxu0 0.0
        %283 = vmatprep.subr.mxu0 0.0
        %284 = vmatpush1.msra.mxu0 0.0
        %285 = vmatprep.subr.mxu0 0.0
        %286 = vmatpush1.msra.mxu0 0.0
        %287 = vmatprep.subr.mxu0 0.0
        %288 = vmatpush1.msra.mxu0 0.0
        %289 = vmatprep.subr.mxu0 0.0
        %290 = vmatpush1.msra.mxu0 0.0
        %291 = vmatprep.subr.mxu0 0.0
        %292 = vmatpush1.msra.mxu0 0.0
        %293 = vmatprep.subr.mxu0 0.0
        %294 = vmatpush1.msra.mxu0 0.0
        %295 = vmatprep.subr.mxu0 0.0
        %296 = vmatpush1.msra.mxu0 0.0
        %297 = vmatprep.subr.mxu0 0.0
        %298 = vmatpush1.msra.mxu0 0.0
        %299 = vmatprep.subr.mxu0 0.0
        %300 = vmatpush1.msra.mxu0 0.0
        %301 = vmatprep.subr.mxu0 0.0
        %302 = vmatpush1.msra.mxu0 0.0
        %303 = vmatprep.subr.mxu0 0.0
        %304 = vmatpush1.msra.mxu0 0.0
        %305 = vmatprep.subr.mxu0 0.0
        %306 = vmatpush1.msra.mxu0 0.0
        %307 = vmatprep.subr.mxu0 0.0
        %308 = vmatpush1.msra.mxu0 0.0
        %309 = vmatprep.subr.mxu0 0.0
        %310 = vmatpush1.msra.mxu0 0.0
        %311 = vmatprep.subr.mxu0 0.0
        %312 = vmatpush1.msra.mxu0 0.0
        %313 = vmatprep.subr.mxu0 0.0
        %314 = vmatpush1.msra.mxu0 0.0
        %315 = vmatprep.subr.mxu0 0.0
        %316 = vmatpush1.msra.mxu0 0.0
        %317 = vmatprep.mubr.f32.mxu0 0.0
        %318 = vmatmul.mubr.f32.gmra.mrb[0].mxu0 %v249
        %v319 = vpop.f32.mrb[0].mxu0
        %v320 = vadd.f32 %v245, %v319
        %v321 = vpop.f32.mrb[0].mxu0
        %322 = vdwg.mxu0
        %323 = vst [vmem:[%s200] sm:$0xff] %v320
        %s324 = sand.u32 %s110, 1
        %s325 = scalar_lea.sflag [#allocation4], %s324
        %s326 = sand.u32 %s110, 1
        %s327 = smul.addr %s326, 8
        %s328 = scalar_lea.vmem [#allocation5], %s327
        // Predicated region
        $region37: #{tpu_custom_call.1} parent=31 // pred_check
          %p329 = pneg %p120
        $region38: #{tpu_custom_call.1} parent=31 // pred_check_branch
          %331 = sbr.rel (%p329) target = $region40
        $region39: #{tpu_custom_call.1} parent=31 // pred_region
          %s333 = ssub.s32 128, 128
          %334 = vsyncadd %s325, %s333
          %s335 = sadd.s32 %s25, %s24
          %s336 = smul.addr %s335, 128
          %s337 = scalar_lea.hbm %s3, %s336
          %s339 = sshll.u32 %s328, 4
          %s340 = int_to_ptr.vmem [resolvable:$true] %s339
          %342 = dma.vmem_to_hbm [thread:$0]  %s340, 128, %s337, %s325
        $region40: #{tpu_custom_call.1} parent=31 // pred_fallthru
          _
      $region32: #{tpu_custom_call.1} parent=5 // pred_fallthru
        _
      %p343 = scmp.le.s32.totalorder 2, %s15
      // Predicated region
      $region41: #{tpu_custom_call.1} parent=5 // pred_check
        %p344 = pneg %p343
      $region42: #{tpu_custom_call.1} parent=5 // pred_check_branch
        %346 = sbr.rel (%p344) target = $region44
      $region43: #{tpu_custom_call.1} parent=5 // pred_region
        %s347 = ssub.s32 %s15, 2
        // Predicated region
        $region45: #{tpu_custom_call.1} parent=43 // pred_check
          %p348 = pneg %p126
        $region46: #{tpu_custom_call.1} parent=43 // pred_check_branch
          %350 = sbr.rel (%p348) target = $region48
        $region47: #{tpu_custom_call.1} parent=43 // pred_region
          %s351 = sand.u32 %s111, 1
          %s352 = scalar_lea.sflag [#allocation4], %s351
          %s353 = sand.u32 %s111, 1
          %s354 = smul.addr %s353, 8
          %s355 = scalar_lea.vmem [#allocation5], %s354
          %356 = dma.done %s352, 128
        $region48: #{tpu_custom_call.1} parent=43 // pred_fallthru
          _
      $region44: #{tpu_custom_call.1} parent=5 // pred_fallthru
        _
    $region6: #{tpu_custom_call.1} parent=1 // loop_footer
      %s19 = sadd.s32 1, %s15
    $region7: #{tpu_custom_call.1} parent=1 // loop_footer_branch
      %14 = sbr.rel target = $region3
    $region8: #{tpu_custom_call.1} parent=1 // loop_exit
      _
    %357 = vsyncpa [#allocation3], 1
    %s358 = scalar_lea.sflag [#allocation3], 1
    %359 = vsyncpa %s358, 1
    %360 = vsyncpa [#allocation4], 1
    %s361 = scalar_lea.sflag [#allocation4], 1
    %362 = vsyncpa %s361, 1

</llo_original>
